<compile_context>
chip_gen: v6e
topology: v6e:2x2x1
jax: 0.10.0
libtpu: 0.0.40
codegen_flags: <defaults>
</compile_context>

<pallas_src>
import jax
import jax.numpy as jnp
from jax import lax
from jax.experimental import pallas as pl
from jax.experimental.pallas import tpu as pltpu


def learner_kernel(x_ref, w1_ref, b1_ref, w23_ref, b23_ref, o_ref):
    # x_ref:   (TILE_B, D)     f32  (cast to bf16 here: one HBM pass over x)
    # w1_ref:  (D, 128)        bf16 (pre-transposed Linear-1 weight, resident)
    # b1_ref:  (1, 128)        f32
    # w23_ref: (1, 128)        f32  (fused W2.T @ W3.T, presented as a row)
    # b23_ref: (1, 1)          f32  (fused b2 @ W3.T + b3)
    # o_ref:   (1, 1, TILE_B)  f32  (lane-dense: batch lives on the lane axis)
    x = x_ref[...].astype(jnp.bfloat16)
    h1 = jnp.dot(x, w1_ref[...], preferred_element_type=jnp.float32)
    h1 = jnp.maximum(h1 + b1_ref[...], 0.0)                    # (TILE_B, 128) f32
    # Fused layers 2+3: contract the 128 hidden units; batch lands on lanes so
    # the store below is unmasked/lane-dense.  f32 epilogue throughout.
    logits = lax.dot_general(
        w23_ref[...], h1,
        dimension_numbers=(((1,), (1,)), ((), ())),
        preferred_element_type=jnp.float32,
    ) + b23_ref[...]                                           # (1, TILE_B) f32
    o_ref[...] = jax.nn.sigmoid(logits).reshape(o_ref.shape)


def prepare_learner_params(w1, b1, w2, b2, w3, b3):
    """One-time weight preprocessing (call at model load, not per forward).

    w1: (128, D), b1: (128,)   -- nn.Linear(input_dim, 128) layout
    w2: (32, 128), b2: (32,)   -- nn.Linear(128, 32)
    w3: (1, 32),   b3: (1,)    -- nn.Linear(32, 1)
    """
    w1 = jnp.asarray(w1, jnp.float32)
    w2 = jnp.asarray(w2, jnp.float32)
    w3 = jnp.asarray(w3, jnp.float32)
    h1_dim = w1.shape[0]
    w1t_bf16 = w1.T.astype(jnp.bfloat16)                               # (D, 128)
    b1_row = jnp.asarray(b1, jnp.float32).reshape(1, h1_dim)           # (1, 128)
    # No activation between layers 2 and 3 in forward(), so fold them:
    #   y = sigmoid((h1 @ W2.T + b2) @ W3.T + b3)
    #     = sigmoid(h1 @ (W2.T @ W3.T) + (b2 @ W3.T + b3))
    w23_row = (w2.T @ w3.T).reshape(1, h1_dim)                         # (1, 128)
    b23 = (jnp.asarray(b2, jnp.float32) @ w3.T
           + jnp.asarray(b3, jnp.float32)).reshape(1, 1)               # (1, 1)
    return w1t_bf16, b1_row, w23_row, b23


def _pick_tile_b(batch, input_dim):
    """Batch-tile rows: ~8 MiB f32 x block per pipeline buffer; >=2 tiles when
    possible (feeds both v7x TensorCores); single full-array block for tiny or
    non-8-aligned batches (allowed: block dims equal to full array dims)."""
    rows_in_budget = (8 * 1024 * 1024) // (input_dim * 4)
    cap = int(max(8, min(2048, (rows_in_budget // 8) * 8)))
    if batch <= cap:
        if batch >= 16 and batch % 8 == 0:
            return ((batch // 2) + 7) // 8 * 8     # two tiles (second may be ragged)
        return batch                               # one full-array block
    return cap


def learner_forward(x, params, *, tile_b=None):
    """Eval-mode Learner forward.  x: (B, D) f32 -> (B, 1) f32 probabilities."""
    w1t_bf16, b1_row, w23_row, b23 = params
    B, D = x.shape
    h1_dim = w1t_bf16.shape[1]

    if tile_b is None:
        tile_b = _pick_tile_b(B, D)
    tile_b = min(tile_b, B)
    n_tiles = pl.cdiv(B, tile_b)

    out = pl.pallas_call(
        learner_kernel,
        out_shape=jax.ShapeDtypeStruct((n_tiles, 1, tile_b), jnp.float32),
        grid=(n_tiles,),
        in_specs=[
            pl.BlockSpec((tile_b, D), lambda i: (i, 0)),     # x: streamed, ragged tail OK
            pl.BlockSpec((D, h1_dim), lambda i: (0, 0)),     # W1.T: VMEM-resident
            pl.BlockSpec((1, h1_dim), lambda i: (0, 0)),     # b1
            pl.BlockSpec((1, h1_dim), lambda i: (0, 0)),     # fused W23 row
            pl.BlockSpec((1, 1), lambda i: (0, 0)),          # fused b23
        ],
        out_specs=pl.BlockSpec((1, 1, tile_b), lambda i: (i, 0, 0)),   # lane-dense rows
        compiler_params=pltpu.CompilerParams(
            dimension_semantics=("parallel",),               # megacore split on v7x
            vmem_limit_bytes=40 * 1024 * 1024,               # > v5e 16 MiB default, < v7x 64 MiB/TC
        ),
    )(x, w1t_bf16, b1_row, w23_row, b23)

    # Rows >= B of the last (ragged) tile were computed from undefined reads;
    # this slice drops them -- keep it.
    return out.reshape(n_tiles * tile_b)[:B].reshape(B, 1)


def _reference_forward(x, w1, b1, w2, b2, w3, b3):
    h1 = jnp.maximum(x @ w1.T + b1, 0.0)
    h2 = h1 @ w2.T + b2
    return jax.nn.sigmoid(h2 @ w3.T + b3)


def xavier_normal(key, shape):
    # shape = (out_features, in_features), matching nn.Linear.weight
    fan_out, fan_in = shape
    std = (2.0 / (fan_in + fan_out)) ** 0.5
    return std * jax.random.normal(key, shape, dtype=jnp.float32)


if __name__ == "__main__":
    input_dim = 256              # production is 2048; small shapes for the demo
    h1_dim, h2_dim, out_dim = 128, 32, 1

    key = jax.random.PRNGKey(0)
    k1, k2, k3, kb1, kb2, kb3, kxa, kxb = jax.random.split(key, 8)

    W1 = xavier_normal(k1, (h1_dim, input_dim))
    W2 = xavier_normal(k2, (h2_dim, h1_dim))
    W3 = xavier_normal(k3, (out_dim, h2_dim))
    b1 = 0.01 * jax.random.normal(kb1, (h1_dim,), dtype=jnp.float32)
    b2 = 0.01 * jax.random.normal(kb2, (h2_dim,), dtype=jnp.float32)
    b3 = 0.01 * jax.random.normal(kb3, (out_dim,), dtype=jnp.float32)

    # One-time weight preprocessing, hoisted out of the per-call path.
    params = prepare_learner_params(W1, b1, W2, b2, W3, b3)
    fwd = jax.jit(learner_forward)

    # Case A: tiny batch, not a multiple of 8 -> single full-array block.
    # Case B: two tiles with a ragged final block (exercises the no-pad path).
    for batch, kx in ((12, kxa), (200, kxb)):
        x = jax.random.normal(kx, (batch, input_dim), dtype=jnp.float32)
        out = jax.block_until_ready(fwd(x, params))
        ref = _reference_forward(x, W1, b1, W2, b2, W3, b3)
        assert out.shape == (batch, 1), out.shape
        # Tolerance loosened for the in-kernel bf16 cast of x / W1 (f32 accumulation).
        err = float(jnp.max(jnp.abs(out - ref)))
        assert jnp.allclose(out, ref, atol=2e-2, rtol=2e-2), err

    print("KERNEL_OK")
</pallas_src>

<mosaic_0001>
module attributes {stable_mosaic.version = 11 : i64} {
  func.func @learner_kernel(%arg0: i32, %arg1: memref<12x256xf32, #tpu.memory_space<vmem>>, %arg2: memref<256x128xbf16, #tpu.memory_space<vmem>>, %arg3: memref<1x128xf32, #tpu.memory_space<vmem>>, %arg4: memref<1x128xf32, #tpu.memory_space<vmem>>, %arg5: memref<1x1xf32, #tpu.memory_space<vmem>>, %arg6: memref<1x1x12xf32, #tpu.memory_space<vmem>>) attributes {dimension_semantics = [#tpu.dimension_semantics<parallel>], iteration_bounds = array<i64: 1>, scalar_prefetch = 0 : i64, scratch_operands = 0 : i64, tpu.core_type = #tpu.core_type<tc>, window_params = [{transform_indices = @transform_0, window_bounds = array<i64: 12, 256>}, {pipeline_mode = #tpu.pipeline_mode<synchronous>, transform_indices = @transform_1, window_bounds = array<i64: 256, 128>}, {pipeline_mode = #tpu.pipeline_mode<synchronous>, transform_indices = @transform_2, window_bounds = array<i64: 1, 128>}, {pipeline_mode = #tpu.pipeline_mode<synchronous>, transform_indices = @transform_3, window_bounds = array<i64: 1, 128>}, {pipeline_mode = #tpu.pipeline_mode<synchronous>, transform_indices = @transform_4, window_bounds = array<i64: 1, 1>}, {transform_indices = @transform_5, window_bounds = array<i64: 1, 1, 12>}]} {
    %c0 = arith.constant 0 : index
    %c0_0 = arith.constant 0 : index
    %0 = vector.load %arg1[%c0, %c0_0] : memref<12x256xf32, #tpu.memory_space<vmem>>, vector<12x256xf32>
    %1 = arith.truncf %0 : vector<12x256xf32> to vector<12x256xbf16>
    %c0_1 = arith.constant 0 : index
    %c0_2 = arith.constant 0 : index
    %2 = vector.load %arg2[%c0_1, %c0_2] : memref<256x128xbf16, #tpu.memory_space<vmem>>, vector<256x128xbf16>
    %cst = arith.constant dense<0.000000e+00> : vector<12x128xf32>
    %3 = tpu.matmul %1, %2, %cst {dimension_numbers = #tpu.dot_dimension_numbers<[1], [0], [0], [1], [0, 0, 1, 1], [], []>} : vector<12x256xbf16>, vector<256x128xbf16>, vector<12x128xf32> -> vector<12x128xf32>
    %c0_3 = arith.constant 0 : index
    %c0_4 = arith.constant 0 : index
    %4 = vector.load %arg3[%c0_3, %c0_4] : memref<1x128xf32, #tpu.memory_space<vmem>>, vector<1x128xf32>
    %5 = vector.broadcast %4 : vector<1x128xf32> to vector<12x128xf32>
    %6 = arith.addf %3, %5 : vector<12x128xf32>
    %cst_5 = arith.constant 0.000000e+00 : f32
    %7 = vector.broadcast %cst_5 : f32 to vector<12x128xf32>
    %8 = arith.maximumf %6, %7 : vector<12x128xf32>
    %c0_6 = arith.constant 0 : index
    %c0_7 = arith.constant 0 : index
    %9 = vector.load %arg4[%c0_6, %c0_7] : memref<1x128xf32, #tpu.memory_space<vmem>>, vector<1x128xf32>
    %cst_8 = arith.constant dense<0.000000e+00> : vector<1x12xf32>
    %10 = tpu.matmul %9, %8, %cst_8 {dimension_numbers = #tpu.dot_dimension_numbers<[1], [1], [0], [0], [0, 0, 1, 0], [], []>} : vector<1x128xf32>, vector<12x128xf32>, vector<1x12xf32> -> vector<1x12xf32>
    %c0_9 = arith.constant 0 : index
    %c0_10 = arith.constant 0 : index
    %11 = vector.load %arg5[%c0_9, %c0_10] : memref<1x1xf32, #tpu.memory_space<vmem>>, vector<1x1xf32>
    %12 = vector.broadcast %11 : vector<1x1xf32> to vector<1x12xf32>
    %13 = arith.addf %10, %12 : vector<1x12xf32>
    %14 = arith.negf %13 : vector<1x12xf32>
    %15 = math.exp %14 : vector<1x12xf32>
    %cst_11 = arith.constant 1.000000e+00 : f32
    %16 = vector.broadcast %cst_11 : f32 to vector<1x12xf32>
    %17 = arith.addf %16, %15 : vector<1x12xf32>
    %18 = arith.divf %16, %17 : vector<1x12xf32>
    %19 = vector.shape_cast %18 : vector<1x12xf32> to vector<1x1x12xf32>
    %c0_12 = arith.constant 0 : index
    %c0_13 = arith.constant 0 : index
    %c0_14 = arith.constant 0 : index
    %20 = vector.load %arg6[%c0_12, %c0_13, %c0_14] : memref<1x1x12xf32, #tpu.memory_space<vmem>>, vector<1x1x12xf32>
    tpu.vector_store %arg6[%c0_12, %c0_13, %c0_14], %19 {strides = array<i32>} : memref<1x1x12xf32, #tpu.memory_space<vmem>>, vector<1x1x12xf32>,
    return
  }
  func.func @transform_0(%arg0: i32) -> (i32, i32) {
    %c0_i32 = arith.constant 0 : i32
    %c0_i32_0 = arith.constant 0 : i32
    return %arg0, %c0_i32 : i32, i32
  }
  func.func @transform_1(%arg0: i32) -> (i32, i32) {
    %c0_i32 = arith.constant 0 : i32
    %c0_i32_0 = arith.constant 0 : i32
    %c0_i32_1 = arith.constant 0 : i32
    return %c0_i32, %c0_i32_0 : i32, i32
  }
  func.func @transform_2(%arg0: i32) -> (i32, i32) {
    %c0_i32 = arith.constant 0 : i32
    %c0_i32_0 = arith.constant 0 : i32
    %c0_i32_1 = arith.constant 0 : i32
    return %c0_i32, %c0_i32_0 : i32, i32
  }
  func.func @transform_3(%arg0: i32) -> (i32, i32) {
    %c0_i32 = arith.constant 0 : i32
    %c0_i32_0 = arith.constant 0 : i32
    %c0_i32_1 = arith.constant 0 : i32
    return %c0_i32, %c0_i32_0 : i32, i32
  }
  func.func @transform_4(%arg0: i32) -> (i32, i32) {
    %c0_i32 = arith.constant 0 : i32
    %c0_i32_0 = arith.constant 0 : i32
    %c0_i32_1 = arith.constant 0 : i32
    return %c0_i32, %c0_i32_0 : i32, i32
  }
  func.func @transform_5(%arg0: i32) -> (i32, i32, i32) {
    %c0_i32 = arith.constant 0 : i32
    %c0_i32_0 = arith.constant 0 : i32
    %c0_i32_1 = arith.constant 0 : i32
    return %arg0, %c0_i32, %c0_i32_0 : i32, i32, i32
  }
}

</mosaic_0001>

<llo_original>
// kernel: learner_forward.1
$region0: #{learner_forward.1}
  #allocation0 [shape = 'u32[]', space=smem, size = 0x4, offset = 0x4, fixed_abs, tag = 'smem constant byte address 0x4 - core index']
  #allocation1 [shape = 'u32[144,128]{1,0:T(1,128)}', space=vmem, size = 0x12000, scoped, tag = 'internal scratch']
  #allocation2 [shape = 'f32[1,1]{1,0:T(1,128)S(1)}', space=vmem, size = 0x200, scoped, tag = 'scoped memory for learner_forward.1']
  %s0 = inlined_call_operand.hbm [shape: f32[12,256], index: 0, kind: input, shape index: {}]
  %s1 = inlined_call_operand.hbm [shape: bf16[256,128], index: 1, kind: input, shape index: {}]
  %s2 = inlined_call_operand.vmem [shape: f32[1,128], index: 2, kind: input, shape index: {}]
  %s3 = inlined_call_operand.vmem [shape: f32[1,128], index: 3, kind: input, shape index: {}]
  %s4 = inlined_call_operand.<no memory space> [shape: f32[1,1], index: 4, kind: input, shape index: {}]
  %s5 = inlined_call_operand.hbm [shape: f32[1,1,12], index: 5, kind: output, shape index: {}]
  %s6 = sld [smem:[#allocation0]]
  $region38: #{learner_forward.1} parent=0
    _
  %s8 = ssub.s32 1, %s6
  %s9 = scalar_select 0, %s8, %s6
  %v10 = vstv %s4
  %11 = vst [vmem:[#allocation2] sm:$0x1] %v10
  $region1: #{learner_forward.1} parent=0
    #allocation3 [shape = 'u8[16384]{0}', space=vmem, size = 0x4000, scoped, tag = 'input window, operand 0, single buffered']
    #allocation4 [shape = 's32[1]{0}', space=sflag, size = 0x4, scoped, tag = 'scoped memory for learner_forward.1']
    #allocation5 [shape = 's32[1]{0}', space=sflag, size = 0x4, scoped, tag = 'scoped memory for learner_forward.1']
    #allocation6 [shape = 'u8[65536]{0}', space=vmem, size = 0x10000, scoped, tag = 'input window, operand 1, single buffered']
    #allocation7 [shape = 's32[1]{0}', space=sflag, size = 0x4, scoped, tag = 'scoped memory for learner_forward.1']
    #allocation8 [shape = 'u8[512]{0}', space=vmem, size = 0x400, scoped, tag = 'output window, operand 0, single buffered']
    %12 = vsyncpa [#allocation4], 0
    %13 = vsyncpa [#allocation7], 0
    %14 = vsyncpa [#allocation5], 0
    // Predicated region
    $region2: #{learner_forward.1} parent=1 // pred_check
      _
    $region3: #{learner_forward.1} parent=1 // pred_check_branch
      %16 = sbr.rel (0) target = $region5
    $region4: #{learner_forward.1} parent=1 // pred_region
      %s18 = ssub.s32 512, 512
      %19 = vsyncadd [#allocation4], %s18
      %s20 = sshll.u32 [#allocation3], 4
      %s21 = int_to_ptr.vmem [resolvable:$true] %s20
      %26 = dma.hbm_to_vmem [thread:$0]  %s0, 512, %s21, [#allocation4], 256, 256, 16
    $region5: #{learner_forward.1} parent=1 // pred_fallthru
      _
    // Predicated region
    $region6: #{learner_forward.1} parent=1 // pred_check
      _
    $region7: #{learner_forward.1} parent=1 // pred_check_branch
      %28 = sbr.rel (0) target = $region9
    $region8: #{learner_forward.1} parent=1 // pred_region
      %s30 = ssub.s32 2048, 2048
      %31 = vsyncadd [#allocation7], %s30
      %s32 = sshll.u32 [#allocation6], 4
      %s33 = int_to_ptr.vmem [resolvable:$true] %s32
      %38 = dma.hbm_to_vmem [thread:$0]  %s1, 2048, %s33, [#allocation7], 64, 64, 4
    $region9: #{learner_forward.1} parent=1 // pred_fallthru
      _
    // Predicated region
    $region10: #{learner_forward.1} parent=1 // pred_check
      _
    $region11: #{learner_forward.1} parent=1 // pred_check_branch
      %40 = sbr.rel (0) target = $region13
    $region12: #{learner_forward.1} parent=1 // pred_region
      _
    $region13: #{learner_forward.1} parent=1 // pred_fallthru
      _
    // Predicated region
    $region14: #{learner_forward.1} parent=1 // pred_check
      _
    $region15: #{learner_forward.1} parent=1 // pred_check_branch
      %42 = sbr.rel (0) target = $region17
    $region16: #{learner_forward.1} parent=1 // pred_region
      _
    $region17: #{learner_forward.1} parent=1 // pred_fallthru
      _
    // Predicated region
    $region18: #{learner_forward.1} parent=1 // pred_check
      _
    $region19: #{learner_forward.1} parent=1 // pred_check_branch
      %44 = sbr.rel (0) target = $region21
    $region20: #{learner_forward.1} parent=1 // pred_region
      _
    $region21: #{learner_forward.1} parent=1 // pred_fallthru
      _
    // Predicated region
    $region22: #{learner_forward.1} parent=1 // pred_check
      _
    $region23: #{learner_forward.1} parent=1 // pred_check_branch
      %46 = sbr.rel (0) target = $region25
    $region24: #{learner_forward.1} parent=1 // pred_region
      %47 = dma.done [#allocation4], 512
    $region25: #{learner_forward.1} parent=1 // pred_fallthru
      _
    // Predicated region
    $region26: #{learner_forward.1} parent=1 // pred_check
      _
    $region27: #{learner_forward.1} parent=1 // pred_check_branch
      %49 = sbr.rel (0) target = $region29
    $region28: #{learner_forward.1} parent=1 // pred_region
      %50 = dma.done [#allocation7], 2048
    $region29: #{learner_forward.1} parent=1 // pred_fallthru
      _
    %v52 = vld [vmem:[#allocation3] sm:$0xff]
    %v53 = vld [vmem:[#allocation3 + $0x8] sm:$0xff]
    %v54 = vld [vmem:[#allocation3 + $0x10] sm:$0xf]
    %v55 = vld [vmem:[#allocation3 + $0x18] sm:$0xf]
    %v56 = vpack.c.bf16 %v54, %v52
    %v57 = vpack.c.bf16 %v55, %v53
    %v58 = vld [vmem:[#allocation6] sm:$0xf]
    %v59 = vld [vmem:[#allocation6 + $0x4] sm:$0xf]
    %v60 = vld [vmem:[#allocation6 + $0x8] sm:$0xf]
    %v61 = vld [vmem:[#allocation6 + $0xc] sm:$0xf]
    %v62 = vld [vmem:[#allocation6 + $0x10] sm:$0xf]
    %v63 = vld [vmem:[#allocation6 + $0x14] sm:$0xf]
    %v64 = vld [vmem:[#allocation6 + $0x18] sm:$0xf]
    %v65 = vld [vmem:[#allocation6 + $0x1c] sm:$0xf]
    %v66 = vld [vmem:[#allocation6 + $0x20] sm:$0xf]
    %v67 = vld [vmem:[#allocation6 + $0x24] sm:$0xf]
    %v68 = vld [vmem:[#allocation6 + $0x28] sm:$0xf]
    %v69 = vld [vmem:[#allocation6 + $0x2c] sm:$0xf]
    %v70 = vld [vmem:[#allocation6 + $0x30] sm:$0xf]
    %v71 = vld [vmem:[#allocation6 + $0x34] sm:$0xf]
    %v72 = vld [vmem:[#allocation6 + $0x38] sm:$0xf]
    %v73 = vld [vmem:[#allocation6 + $0x3c] sm:$0xf]
    %v74 = vld [vmem:[#allocation6 + $0x40] sm:$0xf]
    %v75 = vld [vmem:[#allocation6 + $0x44] sm:$0xf]
    %v76 = vld [vmem:[#allocation6 + $0x48] sm:$0xf]
    %v77 = vld [vmem:[#allocation6 + $0x4c] sm:$0xf]
    %v78 = vld [vmem:[#allocation6 + $0x50] sm:$0xf]
    %v79 = vld [vmem:[#allocation6 + $0x54] sm:$0xf]
    %v80 = vld [vmem:[#allocation6 + $0x58] sm:$0xf]
    %v81 = vld [vmem:[#allocation6 + $0x5c] sm:$0xf]
    %v82 = vld [vmem:[#allocation6 + $0x60] sm:$0xf]
    %v83 = vld [vmem:[#allocation6 + $0x64] sm:$0xf]
    %v84 = vld [vmem:[#allocation6 + $0x68] sm:$0xf]
    %v85 = vld [vmem:[#allocation6 + $0x6c] sm:$0xf]
    %v86 = vld [vmem:[#allocation6 + $0x70] sm:$0xf]
    %v87 = vld [vmem:[#allocation6 + $0x74] sm:$0xf]
    %v88 = vld [vmem:[#allocation6 + $0x78] sm:$0xf]
    %v89 = vld [vmem:[#allocation6 + $0x7c] sm:$0xf]
    %v90 = vld [vmem:[%s2] sm:$0x1]
    %v92 = vlaneseq
    %v93 = vshrl.u32 %v92, 7
    %v94 = vsub.s32 0, %v93
    %v95 = vrot.slane %v90, %v94
    %v129 = vunpack.c.l.b16 %v58
    %v130 = vunpack.c.l.b16 %v59
    %v131 = vunpack.c.l.b16 %v60
    %v132 = vunpack.c.l.b16 %v61
    %v133 = vunpack.c.l.b16 %v62
    %v134 = vunpack.c.l.b16 %v63
    %v135 = vunpack.c.l.b16 %v64
    %v136 = vunpack.c.l.b16 %v65
    %v137 = vunpack.c.l.b16 %v66
    %v138 = vunpack.c.l.b16 %v67
    %v139 = vunpack.c.l.b16 %v68
    %v140 = vunpack.c.l.b16 %v69
    %v141 = vunpack.c.l.b16 %v70
    %v142 = vunpack.c.l.b16 %v71
    %v143 = vunpack.c.l.b16 %v72
    %v144 = vunpack.c.l.b16 %v73
    %v145 = vunpack.c.l.b16 %v74
    %v146 = vunpack.c.l.b16 %v75
    %v147 = vunpack.c.l.b16 %v76
    %v148 = vunpack.c.l.b16 %v77
    %v149 = vunpack.c.l.b16 %v78
    %v150 = vunpack.c.l.b16 %v79
    %v151 = vunpack.c.l.b16 %v80
    %v152 = vunpack.c.l.b16 %v81
    %v153 = vunpack.c.l.b16 %v82
    %v154 = vunpack.c.l.b16 %v83
    %v155 = vunpack.c.l.b16 %v84
    %v156 = vunpack.c.l.b16 %v85
    %v157 = vunpack.c.l.b16 %v86
    %v158 = vunpack.c.l.b16 %v87
    %v159 = vunpack.c.l.b16 %v88
    %v160 = vunpack.c.l.b16 %v89
    %v161 = vpack.c.b16 %v130, %v129
    %v162 = vpack.c.b16 %v132, %v131
    %v163 = vpack.c.b16 %v134, %v133
    %v164 = vpack.c.b16 %v136, %v135
    %v165 = vpack.c.b16 %v138, %v137
    %v166 = vpack.c.b16 %v140, %v139
    %v167 = vpack.c.b16 %v142, %v141
    %v168 = vpack.c.b16 %v144, %v143
    %v169 = vpack.c.b16 %v146, %v145
    %v170 = vpack.c.b16 %v148, %v147
    %v171 = vpack.c.b16 %v150, %v149
    %v172 = vpack.c.b16 %v152, %v151
    %v173 = vpack.c.b16 %v154, %v153
    %v174 = vpack.c.b16 %v156, %v155
    %v175 = vpack.c.b16 %v158, %v157
    %v176 = vpack.c.b16 %v160, %v159
    %193 = vmatprep.subr.bf16.mxu0 0
    %194 = vmatpush1.bf16.msra.mxu0 %v168
    %195 = vmatprep.subr.bf16.mxu0 0
    %196 = vmatpush1.bf16.msra.mxu0 %v167
    %197 = vmatprep.subr.bf16.mxu0 0
    %198 = vmatpush1.bf16.msra.mxu0 %v166
    %199 = vmatprep.subr.bf16.mxu0 0
    %200 = vmatpush1.bf16.msra.mxu0 %v165
    %201 = vmatprep.subr.bf16.mxu0 0
    %202 = vmatpush1.bf16.msra.mxu0 %v164
    %203 = vmatprep.subr.bf16.mxu0 0
    %204 = vmatpush1.bf16.msra.mxu0 %v163
    %205 = vmatprep.subr.bf16.mxu0 0
    %206 = vmatpush1.bf16.msra.mxu0 %v162
    %207 = vmatprep.subr.bf16.mxu0 0
    %208 = vmatpush1.bf16.msra.mxu0 %v161
    %209 = vmatprep.subr.bf16.mxu0 0
    %210 = vmatpush2.bf16.msra.mxu0 %v176
    %211 = vmatprep.subr.bf16.mxu0 0
    %212 = vmatpush2.bf16.msra.mxu0 %v175
    %213 = vmatprep.subr.bf16.mxu0 0
    %214 = vmatpush2.bf16.msra.mxu0 %v174
    %215 = vmatprep.subr.bf16.mxu0 0
    %216 = vmatpush2.bf16.msra.mxu0 %v173
    %217 = vmatprep.subr.bf16.mxu0 0
    %218 = vmatpush2.bf16.msra.mxu0 %v172
    %219 = vmatprep.subr.bf16.mxu0 0
    %220 = vmatpush2.bf16.msra.mxu0 %v171
    %221 = vmatprep.subr.bf16.mxu0 0
    %222 = vmatpush2.bf16.msra.mxu0 %v170
    %223 = vmatprep.subr.bf16.mxu0 0
    %224 = vmatpush2.bf16.msra.mxu0 %v169
    %225 = vmatprep.mubr.bf16.mxu0 %v57
    %226 = vmatmul.mubr.bf16.gmra.mxu0 %v56
    %v227 = vpop.f32.mrf.mxu0
    %v228 = vadd.f32 %v95, %v227
    %v229 = vpop.f32.mrf.mxu0
    %v230 = vpop.f32.mrf.mxu0
    %v231 = vadd.f32 %v95, %v230
    %v232 = vpop.f32.mrf.mxu0
    %233 = vdwg.mxu0
    %v234 = vmax.f32 %v228, 0.0
    %v235 = vmax.f32 %v231, 0.0
    %v236 = vld [vmem:[%s3] sm:$0x1]
    %v237 = vld [vmem:[#allocation2] sm:$0x1]
    %239 = vset.pattern.permute.xlu0 0
    %240 = vperm.xlu0 %239, %v237
    %v241 = vpop.permute.xlu0 %240
    %v243 = vlaneseq
    %v244 = vshrl.u32 %v243, 7
    %v245 = vsub.s32 0, %v244
    %v246 = vrot.slane %v241, %v245
    %247 = vmatprep.subr.mxu0 0.0
    %248 = vmatpush1.xpose.msra.mxu0 0.0
    %249 = vmatprep.subr.mxu0 0.0
    %250 = vmatpush1.xpose.msra.mxu0 0.0
    %251 = vmatprep.subr.mxu0 0.0
    %252 = vmatpush1.xpose.msra.mxu0 0.0
    %253 = vmatprep.subr.mxu0 0.0
    %254 = vmatpush1.xpose.msra.mxu0 0.0
    %255 = vmatprep.subr.mxu0 0.0
    %256 = vmatpush1.xpose.msra.mxu0 0.0
    %257 = vmatprep.subr.mxu0 0.0
    %258 = vmatpush1.xpose.msra.mxu0 0.0
    %259 = vmatprep.subr.mxu0 0.0
    %260 = vmatpush1.xpose.msra.mxu0 0.0
    %261 = vmatprep.subr.mxu0 0.0
    %262 = vmatpush1.xpose.msra.mxu0 0.0
    %263 = vmatprep.subr.mxu0 0.0
    %264 = vmatpush1.xpose.msra.mxu0 0.0
    %265 = vmatprep.subr.mxu0 0.0
    %266 = vmatpush1.xpose.msra.mxu0 0.0
    %267 = vmatprep.subr.mxu0 0.0
    %268 = vmatpush1.xpose.msra.mxu0 0.0
    %269 = vmatprep.subr.mxu0 0.0
    %270 = vmatpush1.xpose.msra.mxu0 0.0
    %271 = vmatprep.subr.mxu0 0.0
    %272 = vmatpush1.xpose.msra.mxu0 0.0
    %273 = vmatprep.subr.mxu0 0.0
    %274 = vmatpush1.xpose.msra.mxu0 0.0
    %275 = vmatprep.subr.mxu0 0.0
    %276 = vmatpush1.xpose.msra.mxu0 %v235
    %277 = vmatprep.subr.mxu0 0.0
    %278 = vmatpush1.xpose.msra.mxu0 %v234
    %279 = vmatprep.subr.mxu0 0.0
    %280 = vmatpush2.xpose.msra.mxu0 0.0
    %281 = vmatprep.subr.mxu0 0.0
    %282 = vmatpush2.xpose.msra.mxu0 0.0
    %283 = vmatprep.subr.mxu0 0.0
    %284 = vmatpush2.xpose.msra.mxu0 0.0
    %285 = vmatprep.subr.mxu0 0.0
    %286 = vmatpush2.xpose.msra.mxu0 0.0
    %287 = vmatprep.subr.mxu0 0.0
    %288 = vmatpush2.xpose.msra.mxu0 0.0
    %289 = vmatprep.subr.mxu0 0.0
    %290 = vmatpush2.xpose.msra.mxu0 0.0
    %291 = vmatprep.subr.mxu0 0.0
    %292 = vmatpush2.xpose.msra.mxu0 0.0
    %293 = vmatprep.subr.mxu0 0.0
    %294 = vmatpush2.xpose.msra.mxu0 0.0
    %295 = vmatprep.subr.mxu0 0.0
    %296 = vmatpush2.xpose.msra.mxu0 0.0
    %297 = vmatprep.subr.mxu0 0.0
    %298 = vmatpush2.xpose.msra.mxu0 0.0
    %299 = vmatprep.subr.mxu0 0.0
    %300 = vmatpush2.xpose.msra.mxu0 0.0
    %301 = vmatprep.subr.mxu0 0.0
    %302 = vmatpush2.xpose.msra.mxu0 0.0
    %303 = vmatprep.subr.mxu0 0.0
    %304 = vmatpush2.xpose.msra.mxu0 0.0
    %305 = vmatprep.subr.mxu0 0.0
    %306 = vmatpush2.xpose.msra.mxu0 0.0
    %307 = vmatprep.subr.mxu0 0.0
    %308 = vmatpush2.xpose.msra.mxu0 0.0
    %309 = vmatprep.subr.mxu0 0.0
    %310 = vmatpush2.xpose.msra.mxu0 0.0
    %311 = vmatprep.mubr.f32.mxu0 0.0
    %312 = vmatmul.mubr.f32.gmra.mxu0 %v236
    %v313 = vpop.f32.mrf.mxu0
    %v314 = vadd.f32 %v246, %v313
    %v315 = vpop.f32.mrf.mxu0
    %316 = vdwg.mxu0
    %v317 = vxor.u32 %v314, 2147483648
    %v318 = vmul.f32 %v317, 1.442695
    %v319 = vpow.pop %v318
    %v320 = vadd.f32 %v319, 1.0
    %v321 = vrcp.pop %v320
    %v322 = vmul.f32 1.0, %v321
    %vm323 = vcmask 90112
    %324 = vst.msk [vmem:[#allocation8] sm:$0x1] %vm323, %v322
    // Predicated region
    $region30: #{learner_forward.1} parent=1 // pred_check
      _
    $region31: #{learner_forward.1} parent=1 // pred_check_branch
      %326 = sbr.rel (0) target = $region33
    $region32: #{learner_forward.1} parent=1 // pred_region
      %s328 = ssub.s32 16, 16
      %329 = vsyncadd [#allocation5], %s328
      %s331 = sshll.u32 [#allocation8], 4
      %s332 = int_to_ptr.vmem [resolvable:$true] %s331
      %334 = dma.vmem_to_hbm [thread:$0]  %s332, 16, %s5, [#allocation5]
    $region33: #{learner_forward.1} parent=1 // pred_fallthru
      _
    // Predicated region
    $region34: #{learner_forward.1} parent=1 // pred_check
      _
    $region35: #{learner_forward.1} parent=1 // pred_check_branch
      %336 = sbr.rel (0) target = $region37
    $region36: #{learner_forward.1} parent=1 // pred_region
      %337 = dma.done [#allocation5], 16
    $region37: #{learner_forward.1} parent=1 // pred_fallthru
      _
    %338 = vsyncpa [#allocation4], 1
    %339 = vsyncpa [#allocation7], 1
    %340 = vsyncpa [#allocation5], 1

</llo_original>
